<compile_context>
chip_gen: v7x
topology: tpu7x:2x2x1
jax: 0.10.0
libtpu: 0.0.40
codegen_flags: <defaults>
</compile_context>

<pallas_src>
import functools
import math

import jax
import jax.numpy as jnp
from jax.experimental import pallas as pl
from jax.experimental.pallas import tpu as pltpu


def _round_up(x, m):
    return (x + m - 1) // m * m


def caption_embedder_kernel(widx_ref, eidx_ref, mask_ref,   # SMEM scalar prefetch
                            word_hbm, ent_hbm,              # HBM refs (pl.ANY)
                            out_ref,                        # (tile, Dp) VMEM output block
                            sem,                            # shared DMA semaphore (1,)
                            *, tile, unroll):
    base = pl.program_id(0) * tile

    # Issue one row-gather DMA per token, straight into the output block.
    # Partially unrolled so descriptor issue is not bound by loop/branch
    # overhead; all copies signal the same byte-counting semaphore.
    @pl.loop(0, tile, step=unroll)
    def _issue(j0):
        for u in range(unroll):
            j = j0 + u
            t = base + j
            m = mask_ref[t]

            @pl.when(m == 1)          # entity token -> row of entities_encoded
            def _():
                pltpu.make_async_copy(
                    ent_hbm.at[eidx_ref[t]], out_ref.at[j], sem.at[0]).start()

            @pl.when(m != 1)          # regular word -> row of the word table
            def _():
                pltpu.make_async_copy(
                    word_hbm.at[widx_ref[t]], out_ref.at[j], sem.at[0]).start()

    # One aggregate wait: `tile` row copies of Dp*itemsize bytes each sum to
    # exactly one (tile, Dp) slab, so a single slab-sized descriptor waits for
    # all of them (DMA semaphores count bytes).  Padded tail tokens still
    # issue (discarded) word-row-0 copies so this byte count stays fixed.
    pltpu.make_async_copy(out_ref, out_ref, sem.at[0]).wait()


def caption_embedder(caption_indices, entities_encoded, word_embedding_table,
                     pad_token, caption_masks, vocab_size, *, tile=128, unroll=8):
    B, L = caption_indices.shape
    EB, E, D = entities_encoded.shape
    V, D2 = word_embedding_table.shape
    assert V == vocab_size and D2 == D
    assert entities_encoded.dtype == word_embedding_table.dtype
    dtype = word_embedding_table.dtype
    itemsize = jnp.dtype(dtype).itemsize

    T = B * L
    Dp = _round_up(D, 128)                     # lane-dense row width

    # ---- tile selection --------------------------------------------------
    # VMEM footprint is just the output double buffer: 2 * tile * Dp * itemsize.
    # Cap it at ~48 MiB so the same tile also fits v7x's 64 MiB VMEM.
    max_tile_by_vmem = max(8, ((48 << 20) // (2 * Dp * itemsize)) // 8 * 8)
    tile = min(tile, max_tile_by_vmem)
    tile = min(tile, _round_up(T, 8))          # no bigger than the (8-rounded) problem
    tile = max(8, (tile // 8) * 8)             # block 2nd-to-last dim: multiple of 8
    T_pad = _round_up(T, tile)
    if T_pad // tile < 2 and tile % 16 == 0:
        tile //= 2                             # >=2 grid steps so both v7x TCs get work
    grid = T_pad // tile
    unroll = max(1, math.gcd(unroll, tile))    # unroll must divide tile

    # ---- index / mask precompute (tiny int arrays, plain JAX) -------------
    idx = caption_indices.astype(jnp.int32).reshape(-1)             # (T,)
    msk = caption_masks.astype(jnp.int32).reshape(-1)               # (T,)
    widx = jnp.where(idx >= vocab_size, jnp.int32(pad_token), idx)
    widx = jnp.clip(widx, 0, V - 1)
    eidx = idx - vocab_size
    eidx = jnp.where((eidx < 0) | (eidx >= E), E - 1, eidx)
    b_of_t = jnp.arange(T, dtype=jnp.int32) // L
    b_src = jnp.where(b_of_t < EB, b_of_t, 0)   # torch try/except -> batch-0 fallback
    eidx_flat = b_src * E + eidx                                     # rows of (EB*E, Dp)

    pad_t = T_pad - T
    widx = jnp.pad(widx, (0, pad_t))            # padded tokens gather word row 0 (dropped)
    eidx_flat = jnp.pad(eidx_flat, (0, pad_t))
    msk = jnp.pad(msk, (0, pad_t))              # 0 -> word branch
    # TODO(synk): very long captions could feed widx/eidx/msk as per-tile SMEM
    # blocks instead of whole-array scalar prefetch to bound SMEM use.

    # ---- tables stay in HBM; pad model dim so every row is lane-dense -----
    word_tbl = word_embedding_table
    ent_flat = entities_encoded.reshape(EB * E, D)
    if Dp != D:
        word_tbl = jnp.pad(word_tbl, ((0, 0), (0, Dp - D)))
        ent_flat = jnp.pad(ent_flat, ((0, 0), (0, Dp - D)))

    vmem_need = 2 * tile * Dp * itemsize + (1 << 20)
    vmem_limit = vmem_need if vmem_need > (32 << 20) else None

    kern = functools.partial(caption_embedder_kernel, tile=tile, unroll=unroll)

    out = pl.pallas_call(
        kern,
        out_shape=jax.ShapeDtypeStruct((T_pad, Dp), dtype),
        grid_spec=pltpu.PrefetchScalarGridSpec(
            num_scalar_prefetch=3,                       # widx, eidx_flat, msk -> SMEM
            grid=(grid,),
            in_specs=[
                pl.BlockSpec(memory_space=pl.ANY),       # word table: HBM, manual DMA
                pl.BlockSpec(memory_space=pl.ANY),       # flattened entities: HBM
            ],
            out_specs=pl.BlockSpec((tile, Dp), lambda i, widx, eidx, msk: (i, 0)),
            scratch_shapes=[
                pltpu.SemaphoreType.DMA((1,)),           # one shared byte-counting sem
            ],
        ),
        compiler_params=pltpu.CompilerParams(
            dimension_semantics=("parallel",),
            vmem_limit_bytes=vmem_limit),
    )(widx, eidx_flat, msk, word_tbl, ent_flat)

    # With D % 128 == 0 and tile | T these are metadata-only (no extra HBM pass).
    return out[:T, :D].reshape(B, L, D)


def caption_embedder_ref(caption_indices, entities_encoded, word_embedding_table,
                         pad_token, caption_masks, vocab_size):
    """Plain-JAX reference mirroring the PyTorch forward."""
    E = entities_encoded.shape[1]
    idx = caption_indices.astype(jnp.int32)
    word_idx = jnp.where(idx >= vocab_size, pad_token, idx)
    ent_idx = idx - vocab_size
    ent_idx = jnp.where((ent_idx < 0) | (ent_idx >= E), E - 1, ent_idx)
    emb_w = word_embedding_table[word_idx]                         # [B, L, D]
    emb_e = jnp.take_along_axis(entities_encoded,
                                ent_idx[:, :, None], axis=1)       # [B, L, D]
    return jnp.where(caption_masks[:, :, None] == 1, emb_e, emb_w)


if __name__ == "__main__":
    B, L, V, E, D = 2, 128, 64, 8, 128
    PAD = 0

    key = jax.random.PRNGKey(0)
    k_idx, k_tbl, k_ent = jax.random.split(key, 3)

    # token ids in [0, V + E): some regular words, some entity tokens
    caption_indices = jax.random.randint(k_idx, (B, L), 0, V + E, dtype=jnp.int32)
    # mask: 1 where the token is an entity (id >= vocab_size)
    caption_masks = (caption_indices >= V).astype(jnp.int32)

    # deterministic "parameters" (word_embedding weight) and entity encodings
    word_embedding_table = jax.random.normal(k_tbl, (V, D), dtype=jnp.float32)
    entities_encoded = jax.random.normal(k_ent, (B, E, D), dtype=jnp.float32)

    out = caption_embedder(caption_indices, entities_encoded,
                           word_embedding_table, PAD, caption_masks, V)
    out = jax.block_until_ready(out)

    ref = caption_embedder_ref(caption_indices, entities_encoded,
                               word_embedding_table, PAD, caption_masks, V)
    assert out.shape == (B, L, D)
    assert jnp.allclose(out, ref, atol=1e-6, rtol=1e-6)

    print("KERNEL_OK")
</pallas_src>

<mosaic_0001>
module attributes {stable_mosaic.version = 11 : i64} {
  func.func @caption_embedder_kernel(%arg0: i32, %arg1: memref<256xi32, #tpu.memory_space<smem>>, %arg2: memref<256xi32, #tpu.memory_space<smem>>, %arg3: memref<256xi32, #tpu.memory_space<smem>>, %arg4: memref<64x128xf32, #tpu.memory_space<any>>, %arg5: memref<16x128xf32, #tpu.memory_space<any>>, %arg6: memref<128x128xf32, #tpu.memory_space<vmem>>, %arg7: memref<1x!tpu.dma_semaphore, #tpu.memory_space<semaphore_mem>>) attributes {dimension_semantics = [#tpu.dimension_semantics<parallel>], iteration_bounds = array<i64: 2>, scalar_prefetch = 3 : i64, scratch_operands = 1 : i64, tpu.core_type = #tpu.core_type<tc>, window_params = [{}, {}, {transform_indices = @transform_2, window_bounds = array<i64: 128, 128>}]} {
    %c128_i32 = arith.constant 128 : i32
    %0 = arith.muli %arg0, %c128_i32 : i32
    %c0_i32 = arith.constant 0 : i32
    %c16_i32 = arith.constant 16 : i32
    %1 = arith.addi %c0_i32, %c16_i32 : i32
    %c1_i32 = arith.constant 1 : i32
    scf.for %arg8 = %c0_i32 to %1 step %c1_i32  : i32 {
      %c8_i32 = arith.constant 8 : i32
      %4 = arith.muli %arg8, %c8_i32 : i32
      %c0_i32_2 = arith.constant 0 : i32
      %5 = arith.addi %c0_i32_2, %4 : i32
      %c0_i32_3 = arith.constant 0 : i32
      %6 = arith.addi %5, %c0_i32_3 : i32
      %7 = arith.addi %0, %6 : i32
      %8 = arith.index_cast %7 : i32 to index
      %9 = memref.load %arg3[%8] : memref<256xi32, #tpu.memory_space<smem>>
      %c1_i32_4 = arith.constant 1 : i32
      %10 = arith.cmpi eq, %9, %c1_i32_4 : i32
      %11 = arith.extui %10 : i1 to i32
      %c0_i32_5 = arith.constant 0 : i32
      %12 = arith.cmpi ne, %11, %c0_i32_5 : i32
      scf.if %12 {
        %86 = arith.index_cast %7 : i32 to index
        %87 = memref.load %arg2[%86] : memref<256xi32, #tpu.memory_space<smem>>
        %c0_i32_37 = arith.constant 0 : i32
        %c0_i32_38 = arith.constant 0 : i32
        %88 = tpu.memref_slice %arg5[%87, %c0_i32_38] : memref<16x128xf32, #tpu.memory_space<any>> -> memref<1x128xf32, #tpu.memory_space<any>>
        %89 = tpu.memref_squeeze %88 : memref<1x128xf32, #tpu.memory_space<any>> -> memref<128xf32, #tpu.memory_space<any>>
        %c0_i32_39 = arith.constant 0 : i32
        %90 = tpu.memref_slice %arg6[%6, %c0_i32_39] : memref<128x128xf32, #tpu.memory_space<vmem>> -> memref<1x128xf32, #tpu.memory_space<vmem>>
        %91 = tpu.memref_squeeze %90 : memref<1x128xf32, #tpu.memory_space<vmem>> -> memref<128xf32, #tpu.memory_space<vmem>>
        %92 = tpu.memref_slice %arg7[%c0_i32_37] : memref<1x!tpu.dma_semaphore, #tpu.memory_space<semaphore_mem>> -> memref<1x!tpu.dma_semaphore, #tpu.memory_space<semaphore_mem>>
        %93 = tpu.memref_squeeze %92 : memref<1x!tpu.dma_semaphore, #tpu.memory_space<semaphore_mem>> -> memref<!tpu.dma_semaphore, #tpu.memory_space<semaphore_mem>>
        tpu.enqueue_dma source(%89 : memref<128xf32, #tpu.memory_space<any>>) target(%91 : memref<128xf32, #tpu.memory_space<vmem>>) target_semaphore(%93 : memref<!tpu.dma_semaphore, #tpu.memory_space<semaphore_mem>>)
      } else {
      }
      %c1_i32_6 = arith.constant 1 : i32
      %13 = arith.cmpi ne, %9, %c1_i32_6 : i32
      %14 = arith.extui %13 : i1 to i32
      %c0_i32_7 = arith.constant 0 : i32
      %15 = arith.cmpi ne, %14, %c0_i32_7 : i32
      scf.if %15 {
        %86 = arith.index_cast %7 : i32 to index
        %87 = memref.load %arg1[%86] : memref<256xi32, #tpu.memory_space<smem>>
        %c0_i32_37 = arith.constant 0 : i32
        %c0_i32_38 = arith.constant 0 : i32
        %88 = tpu.memref_slice %arg4[%87, %c0_i32_38] : memref<64x128xf32, #tpu.memory_space<any>> -> memref<1x128xf32, #tpu.memory_space<any>>
        %89 = tpu.memref_squeeze %88 : memref<1x128xf32, #tpu.memory_space<any>> -> memref<128xf32, #tpu.memory_space<any>>
        %c0_i32_39 = arith.constant 0 : i32
        %90 = tpu.memref_slice %arg6[%6, %c0_i32_39] : memref<128x128xf32, #tpu.memory_space<vmem>> -> memref<1x128xf32, #tpu.memory_space<vmem>>
        %91 = tpu.memref_squeeze %90 : memref<1x128xf32, #tpu.memory_space<vmem>> -> memref<128xf32, #tpu.memory_space<vmem>>
        %92 = tpu.memref_slice %arg7[%c0_i32_37] : memref<1x!tpu.dma_semaphore, #tpu.memory_space<semaphore_mem>> -> memref<1x!tpu.dma_semaphore, #tpu.memory_space<semaphore_mem>>
        %93 = tpu.memref_squeeze %92 : memref<1x!tpu.dma_semaphore, #tpu.memory_space<semaphore_mem>> -> memref<!tpu.dma_semaphore, #tpu.memory_space<semaphore_mem>>
        tpu.enqueue_dma source(%89 : memref<128xf32, #tpu.memory_space<any>>) target(%91 : memref<128xf32, #tpu.memory_space<vmem>>) target_semaphore(%93 : memref<!tpu.dma_semaphore, #tpu.memory_space<semaphore_mem>>)
      } else {
      }
      %c1_i32_8 = arith.constant 1 : i32
      %16 = arith.addi %5, %c1_i32_8 : i32
      %17 = arith.addi %0, %16 : i32
      %18 = arith.index_cast %17 : i32 to index
      %19 = memref.load %arg3[%18] : memref<256xi32, #tpu.memory_space<smem>>
      %c1_i32_9 = arith.constant 1 : i32
      %20 = arith.cmpi eq, %19, %c1_i32_9 : i32
      %21 = arith.extui %20 : i1 to i32
      %c0_i32_10 = arith.constant 0 : i32
      %22 = arith.cmpi ne, %21, %c0_i32_10 : i32
      scf.if %22 {
        %86 = arith.index_cast %17 : i32 to index
        %87 = memref.load %arg2[%86] : memref<256xi32, #tpu.memory_space<smem>>
        %c0_i32_37 = arith.constant 0 : i32
        %c0_i32_38 = arith.constant 0 : i32
        %88 = tpu.memref_slice %arg5[%87, %c0_i32_38] : memref<16x128xf32, #tpu.memory_space<any>> -> memref<1x128xf32, #tpu.memory_space<any>>
        %89 = tpu.memref_squeeze %88 : memref<1x128xf32, #tpu.memory_space<any>> -> memref<128xf32, #tpu.memory_space<any>>
        %c0_i32_39 = arith.constant 0 : i32
        %90 = tpu.memref_slice %arg6[%16, %c0_i32_39] : memref<128x128xf32, #tpu.memory_space<vmem>> -> memref<1x128xf32, #tpu.memory_space<vmem>>
        %91 = tpu.memref_squeeze %90 : memref<1x128xf32, #tpu.memory_space<vmem>> -> memref<128xf32, #tpu.memory_space<vmem>>
        %92 = tpu.memref_slice %arg7[%c0_i32_37] : memref<1x!tpu.dma_semaphore, #tpu.memory_space<semaphore_mem>> -> memref<1x!tpu.dma_semaphore, #tpu.memory_space<semaphore_mem>>
        %93 = tpu.memref_squeeze %92 : memref<1x!tpu.dma_semaphore, #tpu.memory_space<semaphore_mem>> -> memref<!tpu.dma_semaphore, #tpu.memory_space<semaphore_mem>>
        tpu.enqueue_dma source(%89 : memref<128xf32, #tpu.memory_space<any>>) target(%91 : memref<128xf32, #tpu.memory_space<vmem>>) target_semaphore(%93 : memref<!tpu.dma_semaphore, #tpu.memory_space<semaphore_mem>>)
      } else {
      }
      %c1_i32_11 = arith.constant 1 : i32
      %23 = arith.cmpi ne, %19, %c1_i32_11 : i32
      %24 = arith.extui %23 : i1 to i32
      %c0_i32_12 = arith.constant 0 : i32
      %25 = arith.cmpi ne, %24, %c0_i32_12 : i32
      scf.if %25 {
        %86 = arith.index_cast %17 : i32 to index
        %87 = memref.load %arg1[%86] : memref<256xi32, #tpu.memory_space<smem>>
        %c0_i32_37 = arith.constant 0 : i32
        %c0_i32_38 = arith.constant 0 : i32
        %88 = tpu.memref_slice %arg4[%87, %c0_i32_38] : memref<64x128xf32, #tpu.memory_space<any>> -> memref<1x128xf32, #tpu.memory_space<any>>
        %89 = tpu.memref_squeeze %88 : memref<1x128xf32, #tpu.memory_space<any>> -> memref<128xf32, #tpu.memory_space<any>>
        %c0_i32_39 = arith.constant 0 : i32
        %90 = tpu.memref_slice %arg6[%16, %c0_i32_39] : memref<128x128xf32, #tpu.memory_space<vmem>> -> memref<1x128xf32, #tpu.memory_space<vmem>>
        %91 = tpu.memref_squeeze %90 : memref<1x128xf32, #tpu.memory_space<vmem>> -> memref<128xf32, #tpu.memory_space<vmem>>
        %92 = tpu.memref_slice %arg7[%c0_i32_37] : memref<1x!tpu.dma_semaphore, #tpu.memory_space<semaphore_mem>> -> memref<1x!tpu.dma_semaphore, #tpu.memory_space<semaphore_mem>>
        %93 = tpu.memref_squeeze %92 : memref<1x!tpu.dma_semaphore, #tpu.memory_space<semaphore_mem>> -> memref<!tpu.dma_semaphore, #tpu.memory_space<semaphore_mem>>
        tpu.enqueue_dma source(%89 : memref<128xf32, #tpu.memory_space<any>>) target(%91 : memref<128xf32, #tpu.memory_space<vmem>>) target_semaphore(%93 : memref<!tpu.dma_semaphore, #tpu.memory_space<semaphore_mem>>)
      } else {
      }
      %c2_i32 = arith.constant 2 : i32
      %26 = arith.addi %5, %c2_i32 : i32
      %27 = arith.addi %0, %26 : i32
      %28 = arith.index_cast %27 : i32 to index
      %29 = memref.load %arg3[%28] : memref<256xi32, #tpu.memory_space<smem>>
      %c1_i32_13 = arith.constant 1 : i32
      %30 = arith.cmpi eq, %29, %c1_i32_13 : i32
      %31 = arith.extui %30 : i1 to i32
      %c0_i32_14 = arith.constant 0 : i32
      %32 = arith.cmpi ne, %31, %c0_i32_14 : i32
      scf.if %32 {
        %86 = arith.index_cast %27 : i32 to index
        %87 = memref.load %arg2[%86] : memref<256xi32, #tpu.memory_space<smem>>
        %c0_i32_37 = arith.constant 0 : i32
        %c0_i32_38 = arith.constant 0 : i32
        %88 = tpu.memref_slice %arg5[%87, %c0_i32_38] : memref<16x128xf32, #tpu.memory_space<any>> -> memref<1x128xf32, #tpu.memory_space<any>>
        %89 = tpu.memref_squeeze %88 : memref<1x128xf32, #tpu.memory_space<any>> -> memref<128xf32, #tpu.memory_space<any>>
        %c0_i32_39 = arith.constant 0 : i32
        %90 = tpu.memref_slice %arg6[%26, %c0_i32_39] : memref<128x128xf32, #tpu.memory_space<vmem>> -> memref<1x128xf32, #tpu.memory_space<vmem>>
        %91 = tpu.memref_squeeze %90 : memref<1x128xf32, #tpu.memory_space<vmem>> -> memref<128xf32, #tpu.memory_space<vmem>>
        %92 = tpu.memref_slice %arg7[%c0_i32_37] : memref<1x!tpu.dma_semaphore, #tpu.memory_space<semaphore_mem>> -> memref<1x!tpu.dma_semaphore, #tpu.memory_space<semaphore_mem>>
        %93 = tpu.memref_squeeze %92 : memref<1x!tpu.dma_semaphore, #tpu.memory_space<semaphore_mem>> -> memref<!tpu.dma_semaphore, #tpu.memory_space<semaphore_mem>>
        tpu.enqueue_dma source(%89 : memref<128xf32, #tpu.memory_space<any>>) target(%91 : memref<128xf32, #tpu.memory_space<vmem>>) target_semaphore(%93 : memref<!tpu.dma_semaphore, #tpu.memory_space<semaphore_mem>>)
      } else {
      }
      %c1_i32_15 = arith.constant 1 : i32
      %33 = arith.cmpi ne, %29, %c1_i32_15 : i32
      %34 = arith.extui %33 : i1 to i32
      %c0_i32_16 = arith.constant 0 : i32
      %35 = arith.cmpi ne, %34, %c0_i32_16 : i32
      scf.if %35 {
        %86 = arith.index_cast %27 : i32 to index
        %87 = memref.load %arg1[%86] : memref<256xi32, #tpu.memory_space<smem>>
        %c0_i32_37 = arith.constant 0 : i32
        %c0_i32_38 = arith.constant 0 : i32
        %88 = tpu.memref_slice %arg4[%87, %c0_i32_38] : memref<64x128xf32, #tpu.memory_space<any>> -> memref<1x128xf32, #tpu.memory_space<any>>
        %89 = tpu.memref_squeeze %88 : memref<1x128xf32, #tpu.memory_space<any>> -> memref<128xf32, #tpu.memory_space<any>>
        %c0_i32_39 = arith.constant 0 : i32
        %90 = tpu.memref_slice %arg6[%26, %c0_i32_39] : memref<128x128xf32, #tpu.memory_space<vmem>> -> memref<1x128xf32, #tpu.memory_space<vmem>>
        %91 = tpu.memref_squeeze %90 : memref<1x128xf32, #tpu.memory_space<vmem>> -> memref<128xf32, #tpu.memory_space<vmem>>
        %92 = tpu.memref_slice %arg7[%c0_i32_37] : memref<1x!tpu.dma_semaphore, #tpu.memory_space<semaphore_mem>> -> memref<1x!tpu.dma_semaphore, #tpu.memory_space<semaphore_mem>>
        %93 = tpu.memref_squeeze %92 : memref<1x!tpu.dma_semaphore, #tpu.memory_space<semaphore_mem>> -> memref<!tpu.dma_semaphore, #tpu.memory_space<semaphore_mem>>
        tpu.enqueue_dma source(%89 : memref<128xf32, #tpu.memory_space<any>>) target(%91 : memref<128xf32, #tpu.memory_space<vmem>>) target_semaphore(%93 : memref<!tpu.dma_semaphore, #tpu.memory_space<semaphore_mem>>)
      } else {
      }
      %c3_i32 = arith.constant 3 : i32
      %36 = arith.addi %5, %c3_i32 : i32
      %37 = arith.addi %0, %36 : i32
      %38 = arith.index_cast %37 : i32 to index
      %39 = memref.load %arg3[%38] : memref<256xi32, #tpu.memory_space<smem>>
      %c1_i32_17 = arith.constant 1 : i32
      %40 = arith.cmpi eq, %39, %c1_i32_17 : i32
      %41 = arith.extui %40 : i1 to i32
      %c0_i32_18 = arith.constant 0 : i32
      %42 = arith.cmpi ne, %41, %c0_i32_18 : i32
      scf.if %42 {
        %86 = arith.index_cast %37 : i32 to index
        %87 = memref.load %arg2[%86] : memref<256xi32, #tpu.memory_space<smem>>
        %c0_i32_37 = arith.constant 0 : i32
        %c0_i32_38 = arith.constant 0 : i32
        %88 = tpu.memref_slice %arg5[%87, %c0_i32_38] : memref<16x128xf32, #tpu.memory_space<any>> -> memref<1x128xf32, #tpu.memory_space<any>>
        %89 = tpu.memref_squeeze %88 : memref<1x128xf32, #tpu.memory_space<any>> -> memref<128xf32, #tpu.memory_space<any>>
        %c0_i32_39 = arith.constant 0 : i32
        %90 = tpu.memref_slice %arg6[%36, %c0_i32_39] : memref<128x128xf32, #tpu.memory_space<vmem>> -> memref<1x128xf32, #tpu.memory_space<vmem>>
        %91 = tpu.memref_squeeze %90 : memref<1x128xf32, #tpu.memory_space<vmem>> -> memref<128xf32, #tpu.memory_space<vmem>>
        %92 = tpu.memref_slice %arg7[%c0_i32_37] : memref<1x!tpu.dma_semaphore, #tpu.memory_space<semaphore_mem>> -> memref<1x!tpu.dma_semaphore, #tpu.memory_space<semaphore_mem>>
        %93 = tpu.memref_squeeze %92 : memref<1x!tpu.dma_semaphore, #tpu.memory_space<semaphore_mem>> -> memref<!tpu.dma_semaphore, #tpu.memory_space<semaphore_mem>>
        tpu.enqueue_dma source(%89 : memref<128xf32, #tpu.memory_space<any>>) target(%91 : memref<128xf32, #tpu.memory_space<vmem>>) target_semaphore(%93 : memref<!tpu.dma_semaphore, #tpu.memory_space<semaphore_mem>>)
      } else {
      }
      %c1_i32_19 = arith.constant 1 : i32
      %43 = arith.cmpi ne, %39, %c1_i32_19 : i32
      %44 = arith.extui %43 : i1 to i32
      %c0_i32_20 = arith.constant 0 : i32
      %45 = arith.cmpi ne, %44, %c0_i32_20 : i32
      scf.if %45 {
        %86 = arith.index_cast %37 : i32 to index
        %87 = memref.load %arg1[%86] : memref<256xi32, #tpu.memory_space<smem>>
        %c0_i32_37 = arith.constant 0 : i32
        %c0_i32_38 = arith.constant 0 : i32
        %88 = tpu.memref_slice %arg4[%87, %c0_i32_38] : memref<64x128xf32, #tpu.memory_space<any>> -> memref<1x128xf32, #tpu.memory_space<any>>
        %89 = tpu.memref_squeeze %88 : memref<1x128xf32, #tpu.memory_space<any>> -> memref<128xf32, #tpu.memory_space<any>>
        %c0_i32_39 = arith.constant 0 : i32
        %90 = tpu.memref_slice %arg6[%36, %c0_i32_39] : memref<128x128xf32, #tpu.memory_space<vmem>> -> memref<1x128xf32, #tpu.memory_space<vmem>>
        %91 = tpu.memref_squeeze %90 : memref<1x128xf32, #tpu.memory_space<vmem>> -> memref<128xf32, #tpu.memory_space<vmem>>
        %92 = tpu.memref_slice %arg7[%c0_i32_37] : memref<1x!tpu.dma_semaphore, #tpu.memory_space<semaphore_mem>> -> memref<1x!tpu.dma_semaphore, #tpu.memory_space<semaphore_mem>>
        %93 = tpu.memref_squeeze %92 : memref<1x!tpu.dma_semaphore, #tpu.memory_space<semaphore_mem>> -> memref<!tpu.dma_semaphore, #tpu.memory_space<semaphore_mem>>
        tpu.enqueue_dma source(%89 : memref<128xf32, #tpu.memory_space<any>>) target(%91 : memref<128xf32, #tpu.memory_space<vmem>>) target_semaphore(%93 : memref<!tpu.dma_semaphore, #tpu.memory_space<semaphore_mem>>)
      } else {
      }
      %c4_i32 = arith.constant 4 : i32
      %46 = arith.addi %5, %c4_i32 : i32
      %47 = arith.addi %0, %46 : i32
      %48 = arith.index_cast %47 : i32 to index
      %49 = memref.load %arg3[%48] : memref<256xi32, #tpu.memory_space<smem>>
      %c1_i32_21 = arith.constant 1 : i32
      %50 = arith.cmpi eq, %49, %c1_i32_21 : i32
      %51 = arith.extui %50 : i1 to i32
      %c0_i32_22 = arith.constant 0 : i32
      %52 = arith.cmpi ne, %51, %c0_i32_22 : i32
      scf.if %52 {
        %86 = arith.index_cast %47 : i32 to index
        %87 = memref.load %arg2[%86] : memref<256xi32, #tpu.memory_space<smem>>
        %c0_i32_37 = arith.constant 0 : i32
        %c0_i32_38 = arith.constant 0 : i32
        %88 = tpu.memref_slice %arg5[%87, %c0_i32_38] : memref<16x128xf32, #tpu.memory_space<any>> -> memref<1x128xf32, #tpu.memory_space<any>>
        %89 = tpu.memref_squeeze %88 : memref<1x128xf32, #tpu.memory_space<any>> -> memref<128xf32, #tpu.memory_space<any>>
        %c0_i32_39 = arith.constant 0 : i32
        %90 = tpu.memref_slice %arg6[%46, %c0_i32_39] : memref<128x128xf32, #tpu.memory_space<vmem>> -> memref<1x128xf32, #tpu.memory_space<vmem>>
        %91 = tpu.memref_squeeze %90 : memref<1x128xf32, #tpu.memory_space<vmem>> -> memref<128xf32, #tpu.memory_space<vmem>>
        %92 = tpu.memref_slice %arg7[%c0_i32_37] : memref<1x!tpu.dma_semaphore, #tpu.memory_space<semaphore_mem>> -> memref<1x!tpu.dma_semaphore, #tpu.memory_space<semaphore_mem>>
        %93 = tpu.memref_squeeze %92 : memref<1x!tpu.dma_semaphore, #tpu.memory_space<semaphore_mem>> -> memref<!tpu.dma_semaphore, #tpu.memory_space<semaphore_mem>>
        tpu.enqueue_dma source(%89 : memref<128xf32, #tpu.memory_space<any>>) target(%91 : memref<128xf32, #tpu.memory_space<vmem>>) target_semaphore(%93 : memref<!tpu.dma_semaphore, #tpu.memory_space<semaphore_mem>>)
      } else {
      }
      %c1_i32_23 = arith.constant 1 : i32
      %53 = arith.cmpi ne, %49, %c1_i32_23 : i32
      %54 = arith.extui %53 : i1 to i32
      %c0_i32_24 = arith.constant 0 : i32
      %55 = arith.cmpi ne, %54, %c0_i32_24 : i32
      scf.if %55 {
        %86 = arith.index_cast %47 : i32 to index
        %87 = memref.load %arg1[%86] : memref<256xi32, #tpu.memory_space<smem>>
        %c0_i32_37 = arith.constant 0 : i32
        %c0_i32_38 = arith.constant 0 : i32
        %88 = tpu.memref_slice %arg4[%87, %c0_i32_38] : memref<64x128xf32, #tpu.memory_space<any>> -> memref<1x128xf32, #tpu.memory_space<any>>
        %89 = tpu.memref_squeeze %88 : memref<1x128xf32, #tpu.memory_space<any>> -> memref<128xf32, #tpu.memory_space<any>>
        %c0_i32_39 = arith.constant 0 : i32
        %90 = tpu.memref_slice %arg6[%46, %c0_i32_39] : memref<128x128xf32, #tpu.memory_space<vmem>> -> memref<1x128xf32, #tpu.memory_space<vmem>>
        %91 = tpu.memref_squeeze %90 : memref<1x128xf32, #tpu.memory_space<vmem>> -> memref<128xf32, #tpu.memory_space<vmem>>
        %92 = tpu.memref_slice %arg7[%c0_i32_37] : memref<1x!tpu.dma_semaphore, #tpu.memory_space<semaphore_mem>> -> memref<1x!tpu.dma_semaphore, #tpu.memory_space<semaphore_mem>>
        %93 = tpu.memref_squeeze %92 : memref<1x!tpu.dma_semaphore, #tpu.memory_space<semaphore_mem>> -> memref<!tpu.dma_semaphore, #tpu.memory_space<semaphore_mem>>
        tpu.enqueue_dma source(%89 : memref<128xf32, #tpu.memory_space<any>>) target(%91 : memref<128xf32, #tpu.memory_space<vmem>>) target_semaphore(%93 : memref<!tpu.dma_semaphore, #tpu.memory_space<semaphore_mem>>)
      } else {
      }
      %c5_i32 = arith.constant 5 : i32
      %56 = arith.addi %5, %c5_i32 : i32
      %57 = arith.addi %0, %56 : i32
      %58 = arith.index_cast %57 : i32 to index
      %59 = memref.load %arg3[%58] : memref<256xi32, #tpu.memory_space<smem>>
      %c1_i32_25 = arith.constant 1 : i32
      %60 = arith.cmpi eq, %59, %c1_i32_25 : i32
      %61 = arith.extui %60 : i1 to i32
      %c0_i32_26 = arith.constant 0 : i32
      %62 = arith.cmpi ne, %61, %c0_i32_26 : i32
      scf.if %62 {
        %86 = arith.index_cast %57 : i32 to index
        %87 = memref.load %arg2[%86] : memref<256xi32, #tpu.memory_space<smem>>
        %c0_i32_37 = arith.constant 0 : i32
        %c0_i32_38 = arith.constant 0 : i32
        %88 = tpu.memref_slice %arg5[%87, %c0_i32_38] : memref<16x128xf32, #tpu.memory_space<any>> -> memref<1x128xf32, #tpu.memory_space<any>>
        %89 = tpu.memref_squeeze %88 : memref<1x128xf32, #tpu.memory_space<any>> -> memref<128xf32, #tpu.memory_space<any>>
        %c0_i32_39 = arith.constant 0 : i32
        %90 = tpu.memref_slice %arg6[%56, %c0_i32_39] : memref<128x128xf32, #tpu.memory_space<vmem>> -> memref<1x128xf32, #tpu.memory_space<vmem>>
        %91 = tpu.memref_squeeze %90 : memref<1x128xf32, #tpu.memory_space<vmem>> -> memref<128xf32, #tpu.memory_space<vmem>>
        %92 = tpu.memref_slice %arg7[%c0_i32_37] : memref<1x!tpu.dma_semaphore, #tpu.memory_space<semaphore_mem>> -> memref<1x!tpu.dma_semaphore, #tpu.memory_space<semaphore_mem>>
        %93 = tpu.memref_squeeze %92 : memref<1x!tpu.dma_semaphore, #tpu.memory_space<semaphore_mem>> -> memref<!tpu.dma_semaphore, #tpu.memory_space<semaphore_mem>>
        tpu.enqueue_dma source(%89 : memref<128xf32, #tpu.memory_space<any>>) target(%91 : memref<128xf32, #tpu.memory_space<vmem>>) target_semaphore(%93 : memref<!tpu.dma_semaphore, #tpu.memory_space<semaphore_mem>>)
      } else {
      }
      %c1_i32_27 = arith.constant 1 : i32
      %63 = arith.cmpi ne, %59, %c1_i32_27 : i32
      %64 = arith.extui %63 : i1 to i32
      %c0_i32_28 = arith.constant 0 : i32
      %65 = arith.cmpi ne, %64, %c0_i32_28 : i32
      scf.if %65 {
        %86 = arith.index_cast %57 : i32 to index
        %87 = memref.load %arg1[%86] : memref<256xi32, #tpu.memory_space<smem>>
        %c0_i32_37 = arith.constant 0 : i32
        %c0_i32_38 = arith.constant 0 : i32
        %88 = tpu.memref_slice %arg4[%87, %c0_i32_38] : memref<64x128xf32, #tpu.memory_space<any>> -> memref<1x128xf32, #tpu.memory_space<any>>
        %89 = tpu.memref_squeeze %88 : memref<1x128xf32, #tpu.memory_space<any>> -> memref<128xf32, #tpu.memory_space<any>>
        %c0_i32_39 = arith.constant 0 : i32
        %90 = tpu.memref_slice %arg6[%56, %c0_i32_39] : memref<128x128xf32, #tpu.memory_space<vmem>> -> memref<1x128xf32, #tpu.memory_space<vmem>>
        %91 = tpu.memref_squeeze %90 : memref<1x128xf32, #tpu.memory_space<vmem>> -> memref<128xf32, #tpu.memory_space<vmem>>
        %92 = tpu.memref_slice %arg7[%c0_i32_37] : memref<1x!tpu.dma_semaphore, #tpu.memory_space<semaphore_mem>> -> memref<1x!tpu.dma_semaphore, #tpu.memory_space<semaphore_mem>>
        %93 = tpu.memref_squeeze %92 : memref<1x!tpu.dma_semaphore, #tpu.memory_space<semaphore_mem>> -> memref<!tpu.dma_semaphore, #tpu.memory_space<semaphore_mem>>
        tpu.enqueue_dma source(%89 : memref<128xf32, #tpu.memory_space<any>>) target(%91 : memref<128xf32, #tpu.memory_space<vmem>>) target_semaphore(%93 : memref<!tpu.dma_semaphore, #tpu.memory_space<semaphore_mem>>)
      } else {
      }
      %c6_i32 = arith.constant 6 : i32
      %66 = arith.addi %5, %c6_i32 : i32
      %67 = arith.addi %0, %66 : i32
      %68 = arith.index_cast %67 : i32 to index
      %69 = memref.load %arg3[%68] : memref<256xi32, #tpu.memory_space<smem>>
      %c1_i32_29 = arith.constant 1 : i32
      %70 = arith.cmpi eq, %69, %c1_i32_29 : i32
      %71 = arith.extui %70 : i1 to i32
      %c0_i32_30 = arith.constant 0 : i32
      %72 = arith.cmpi ne, %71, %c0_i32_30 : i32
      scf.if %72 {
        %86 = arith.index_cast %67 : i32 to index
        %87 = memref.load %arg2[%86] : memref<256xi32, #tpu.memory_space<smem>>
        %c0_i32_37 = arith.constant 0 : i32
        %c0_i32_38 = arith.constant 0 : i32
        %88 = tpu.memref_slice %arg5[%87, %c0_i32_38] : memref<16x128xf32, #tpu.memory_space<any>> -> memref<1x128xf32, #tpu.memory_space<any>>
        %89 = tpu.memref_squeeze %88 : memref<1x128xf32, #tpu.memory_space<any>> -> memref<128xf32, #tpu.memory_space<any>>
        %c0_i32_39 = arith.constant 0 : i32
        %90 = tpu.memref_slice %arg6[%66, %c0_i32_39] : memref<128x128xf32, #tpu.memory_space<vmem>> -> memref<1x128xf32, #tpu.memory_space<vmem>>
        %91 = tpu.memref_squeeze %90 : memref<1x128xf32, #tpu.memory_space<vmem>> -> memref<128xf32, #tpu.memory_space<vmem>>
        %92 = tpu.memref_slice %arg7[%c0_i32_37] : memref<1x!tpu.dma_semaphore, #tpu.memory_space<semaphore_mem>> -> memref<1x!tpu.dma_semaphore, #tpu.memory_space<semaphore_mem>>
        %93 = tpu.memref_squeeze %92 : memref<1x!tpu.dma_semaphore, #tpu.memory_space<semaphore_mem>> -> memref<!tpu.dma_semaphore, #tpu.memory_space<semaphore_mem>>
        tpu.enqueue_dma source(%89 : memref<128xf32, #tpu.memory_space<any>>) target(%91 : memref<128xf32, #tpu.memory_space<vmem>>) target_semaphore(%93 : memref<!tpu.dma_semaphore, #tpu.memory_space<semaphore_mem>>)
      } else {
      }
      %c1_i32_31 = arith.constant 1 : i32
      %73 = arith.cmpi ne, %69, %c1_i32_31 : i32
      %74 = arith.extui %73 : i1 to i32
      %c0_i32_32 = arith.constant 0 : i32
      %75 = arith.cmpi ne, %74, %c0_i32_32 : i32
      scf.if %75 {
        %86 = arith.index_cast %67 : i32 to index
        %87 = memref.load %arg1[%86] : memref<256xi32, #tpu.memory_space<smem>>
        %c0_i32_37 = arith.constant 0 : i32
        %c0_i32_38 = arith.constant 0 : i32
        %88 = tpu.memref_slice %arg4[%87, %c0_i32_38] : memref<64x128xf32, #tpu.memory_space<any>> -> memref<1x128xf32, #tpu.memory_space<any>>
        %89 = tpu.memref_squeeze %88 : memref<1x128xf32, #tpu.memory_space<any>> -> memref<128xf32, #tpu.memory_space<any>>
        %c0_i32_39 = arith.constant 0 : i32
        %90 = tpu.memref_slice %arg6[%66, %c0_i32_39] : memref<128x128xf32, #tpu.memory_space<vmem>> -> memref<1x128xf32, #tpu.memory_space<vmem>>
        %91 = tpu.memref_squeeze %90 : memref<1x128xf32, #tpu.memory_space<vmem>> -> memref<128xf32, #tpu.memory_space<vmem>>
        %92 = tpu.memref_slice %arg7[%c0_i32_37] : memref<1x!tpu.dma_semaphore, #tpu.memory_space<semaphore_mem>> -> memref<1x!tpu.dma_semaphore, #tpu.memory_space<semaphore_mem>>
        %93 = tpu.memref_squeeze %92 : memref<1x!tpu.dma_semaphore, #tpu.memory_space<semaphore_mem>> -> memref<!tpu.dma_semaphore, #tpu.memory_space<semaphore_mem>>
        tpu.enqueue_dma source(%89 : memref<128xf32, #tpu.memory_space<any>>) target(%91 : memref<128xf32, #tpu.memory_space<vmem>>) target_semaphore(%93 : memref<!tpu.dma_semaphore, #tpu.memory_space<semaphore_mem>>)
      } else {
      }
      %c7_i32 = arith.constant 7 : i32
      %76 = arith.addi %5, %c7_i32 : i32
      %77 = arith.addi %0, %76 : i32
      %78 = arith.index_cast %77 : i32 to index
      %79 = memref.load %arg3[%78] : memref<256xi32, #tpu.memory_space<smem>>
      %c1_i32_33 = arith.constant 1 : i32
      %80 = arith.cmpi eq, %79, %c1_i32_33 : i32
      %81 = arith.extui %80 : i1 to i32
      %c0_i32_34 = arith.constant 0 : i32
      %82 = arith.cmpi ne, %81, %c0_i32_34 : i32
      scf.if %82 {
        %86 = arith.index_cast %77 : i32 to index
        %87 = memref.load %arg2[%86] : memref<256xi32, #tpu.memory_space<smem>>
        %c0_i32_37 = arith.constant 0 : i32
        %c0_i32_38 = arith.constant 0 : i32
        %88 = tpu.memref_slice %arg5[%87, %c0_i32_38] : memref<16x128xf32, #tpu.memory_space<any>> -> memref<1x128xf32, #tpu.memory_space<any>>
        %89 = tpu.memref_squeeze %88 : memref<1x128xf32, #tpu.memory_space<any>> -> memref<128xf32, #tpu.memory_space<any>>
        %c0_i32_39 = arith.constant 0 : i32
        %90 = tpu.memref_slice %arg6[%76, %c0_i32_39] : memref<128x128xf32, #tpu.memory_space<vmem>> -> memref<1x128xf32, #tpu.memory_space<vmem>>
        %91 = tpu.memref_squeeze %90 : memref<1x128xf32, #tpu.memory_space<vmem>> -> memref<128xf32, #tpu.memory_space<vmem>>
        %92 = tpu.memref_slice %arg7[%c0_i32_37] : memref<1x!tpu.dma_semaphore, #tpu.memory_space<semaphore_mem>> -> memref<1x!tpu.dma_semaphore, #tpu.memory_space<semaphore_mem>>
        %93 = tpu.memref_squeeze %92 : memref<1x!tpu.dma_semaphore, #tpu.memory_space<semaphore_mem>> -> memref<!tpu.dma_semaphore, #tpu.memory_space<semaphore_mem>>
        tpu.enqueue_dma source(%89 : memref<128xf32, #tpu.memory_space<any>>) target(%91 : memref<128xf32, #tpu.memory_space<vmem>>) target_semaphore(%93 : memref<!tpu.dma_semaphore, #tpu.memory_space<semaphore_mem>>)
      } else {
      }
      %c1_i32_35 = arith.constant 1 : i32
      %83 = arith.cmpi ne, %79, %c1_i32_35 : i32
      %84 = arith.extui %83 : i1 to i32
      %c0_i32_36 = arith.constant 0 : i32
      %85 = arith.cmpi ne, %84, %c0_i32_36 : i32
      scf.if %85 {
        %86 = arith.index_cast %77 : i32 to index
        %87 = memref.load %arg1[%86] : memref<256xi32, #tpu.memory_space<smem>>
        %c0_i32_37 = arith.constant 0 : i32
        %c0_i32_38 = arith.constant 0 : i32
        %88 = tpu.memref_slice %arg4[%87, %c0_i32_38] : memref<64x128xf32, #tpu.memory_space<any>> -> memref<1x128xf32, #tpu.memory_space<any>>
        %89 = tpu.memref_squeeze %88 : memref<1x128xf32, #tpu.memory_space<any>> -> memref<128xf32, #tpu.memory_space<any>>
        %c0_i32_39 = arith.constant 0 : i32
        %90 = tpu.memref_slice %arg6[%76, %c0_i32_39] : memref<128x128xf32, #tpu.memory_space<vmem>> -> memref<1x128xf32, #tpu.memory_space<vmem>>
        %91 = tpu.memref_squeeze %90 : memref<1x128xf32, #tpu.memory_space<vmem>> -> memref<128xf32, #tpu.memory_space<vmem>>
        %92 = tpu.memref_slice %arg7[%c0_i32_37] : memref<1x!tpu.dma_semaphore, #tpu.memory_space<semaphore_mem>> -> memref<1x!tpu.dma_semaphore, #tpu.memory_space<semaphore_mem>>
        %93 = tpu.memref_squeeze %92 : memref<1x!tpu.dma_semaphore, #tpu.memory_space<semaphore_mem>> -> memref<!tpu.dma_semaphore, #tpu.memory_space<semaphore_mem>>
        tpu.enqueue_dma source(%89 : memref<128xf32, #tpu.memory_space<any>>) target(%91 : memref<128xf32, #tpu.memory_space<vmem>>) target_semaphore(%93 : memref<!tpu.dma_semaphore, #tpu.memory_space<semaphore_mem>>)
      } else {
      }
    }
    %c16_i32_0 = arith.constant 16 : i32
    %c0_i32_1 = arith.constant 0 : i32
    %2 = tpu.memref_slice %arg7[%c0_i32_1] : memref<1x!tpu.dma_semaphore, #tpu.memory_space<semaphore_mem>> -> memref<1x!tpu.dma_semaphore, #tpu.memory_space<semaphore_mem>>
    %3 = tpu.memref_squeeze %2 : memref<1x!tpu.dma_semaphore, #tpu.memory_space<semaphore_mem>> -> memref<!tpu.dma_semaphore, #tpu.memory_space<semaphore_mem>>
    tpu.wait_dma2 semaphore(%3 : memref<!tpu.dma_semaphore, #tpu.memory_space<semaphore_mem>>) src(%arg6 : memref<128x128xf32, #tpu.memory_space<vmem>>) dst(%arg6 : memref<128x128xf32, #tpu.memory_space<vmem>>)
    return
  }
  func.func @transform_2(%arg0: i32, %arg1: memref<256xi32, #tpu.memory_space<smem>>, %arg2: memref<256xi32, #tpu.memory_space<smem>>, %arg3: memref<256xi32, #tpu.memory_space<smem>>) -> (i32, i32) {
    %c0_i32 = arith.constant 0 : i32
    %c0_i32_0 = arith.constant 0 : i32
    return %arg0, %c0_i32 : i32, i32
  }
}

</mosaic_0001>

<llo_original>
// kernel: tpu_custom_call.1
$region0: #{tpu_custom_call.1}
  #allocation0 [shape = 'u32[]', space=smem, size = 0x4, offset = 0x4, fixed_abs, tag = 'smem constant byte address 0x4 - core index']
  #allocation1 [shape = 'u32[144,128]{1,0:T(1,128)}', space=vmem, size = 0x12000, scoped, tag = 'internal scratch']
  #allocation2 [shape = 's32[1]{0}', space=sflag, size = 0x4, scoped, tag = 'scratch operand']
  #allocation3 [shape = 's32[1]{0}', space=sflag, size = 0x4, scoped, tag = 'scoped memory for tpu_custom_call.1']
  #allocation4 [shape = 'u8[1024]{0}', space=smem, size = 0x400, scoped, tag = 'prefetched SMEM operand 0']
  #allocation5 [shape = 'u8[1024]{0}', space=smem, size = 0x400, scoped, tag = 'prefetched SMEM operand 1']
  #allocation6 [shape = 'u8[1024]{0}', space=smem, size = 0x400, scoped, tag = 'prefetched SMEM operand 2']
  #allocation9 [shape = 's32[]', space=sflag, size = 0x4, offset = 0, fixed_abs, tag = 'sflag constant byte address 0x0 - dummy sync flag']
  #allocation10 [shape = 's32[]', space=sflag, size = 0x4, offset = 0, fixed_abs, tag = 'sflag constant byte address 0x0 - dummy sync flag']
  #allocation11 [shape = 'u32[]', space=smem, size = 0x4, offset = 0x44, fixed_abs, tag = 'smem constant byte address 0x44 - assertion arg 0']
  #allocation12 [shape = 'u32[]', space=smem, size = 0x4, offset = 0x48, fixed_abs, tag = 'smem constant byte address 0x48 - assertion arg 1']
  #allocation13 [shape = 's32[]', space=sflag, size = 0x4, offset = 0, fixed_abs, tag = 'sflag constant byte address 0x0 - dummy sync flag']
  #allocation14 [shape = 's32[]', space=sflag, size = 0x4, offset = 0, fixed_abs, tag = 'sflag constant byte address 0x0 - dummy sync flag']
  #allocation15 [shape = 's32[]', space=sflag, size = 0x4, offset = 0, fixed_abs, tag = 'sflag constant byte address 0x0 - dummy sync flag']
  #allocation16 [shape = 's32[]', space=sflag, size = 0x4, offset = 0, fixed_abs, tag = 'sflag constant byte address 0x0 - dummy sync flag']
  #allocation17 [shape = 's32[]', space=sflag, size = 0x4, offset = 0, fixed_abs, tag = 'sflag constant byte address 0x0 - dummy sync flag']
  #allocation18 [shape = 's32[]', space=sflag, size = 0x4, offset = 0, fixed_abs, tag = 'sflag constant byte address 0x0 - dummy sync flag']
  #allocation19 [shape = 's32[]', space=sflag, size = 0x4, offset = 0, fixed_abs, tag = 'sflag constant byte address 0x0 - dummy sync flag']
  #allocation20 [shape = 's32[]', space=sflag, size = 0x4, offset = 0, fixed_abs, tag = 'sflag constant byte address 0x0 - dummy sync flag']
  #allocation21 [shape = 's32[]', space=sflag, size = 0x4, offset = 0, fixed_abs, tag = 'sflag constant byte address 0x0 - dummy sync flag']
  #allocation22 [shape = 's32[]', space=sflag, size = 0x4, offset = 0, fixed_abs, tag = 'sflag constant byte address 0x0 - dummy sync flag']
  #allocation23 [shape = 's32[]', space=sflag, size = 0x4, offset = 0, fixed_abs, tag = 'sflag constant byte address 0x0 - dummy sync flag']
  #allocation24 [shape = 's32[]', space=sflag, size = 0x4, offset = 0, fixed_abs, tag = 'sflag constant byte address 0x0 - dummy sync flag']
  #allocation25 [shape = 's32[]', space=sflag, size = 0x4, offset = 0, fixed_abs, tag = 'sflag constant byte address 0x0 - dummy sync flag']
  #allocation26 [shape = 's32[]', space=sflag, size = 0x4, offset = 0, fixed_abs, tag = 'sflag constant byte address 0x0 - dummy sync flag']
  #allocation27 [shape = 's32[]', space=sflag, size = 0x4, offset = 0, fixed_abs, tag = 'sflag constant byte address 0x0 - dummy sync flag']
  #allocation28 [shape = 's32[]', space=sflag, size = 0x4, offset = 0, fixed_abs, tag = 'sflag constant byte address 0x0 - dummy sync flag']
  #allocation29 [shape = 's32[]', space=sflag, size = 0x4, offset = 0, fixed_abs, tag = 'sflag constant byte address 0x0 - dummy sync flag']
  #allocation30 [shape = 's32[]', space=sflag, size = 0x4, offset = 0, fixed_abs, tag = 'sflag constant byte address 0x0 - dummy sync flag']
  #allocation31 [shape = 's32[]', space=sflag, size = 0x4, offset = 0, fixed_abs, tag = 'sflag constant byte address 0x0 - dummy sync flag']
  #allocation32 [shape = 's32[]', space=sflag, size = 0x4, offset = 0, fixed_abs, tag = 'sflag constant byte address 0x0 - dummy sync flag']
  #allocation33 [shape = 's32[]', space=sflag, size = 0x4, offset = 0, fixed_abs, tag = 'sflag constant byte address 0x0 - dummy sync flag']
  #allocation34 [shape = 's32[]', space=sflag, size = 0x4, offset = 0, fixed_abs, tag = 'sflag constant byte address 0x0 - dummy sync flag']
  #allocation35 [shape = 's32[]', space=sflag, size = 0x4, offset = 0, fixed_abs, tag = 'sflag constant byte address 0x0 - dummy sync flag']
  #allocation36 [shape = 's32[]', space=sflag, size = 0x4, offset = 0, fixed_abs, tag = 'sflag constant byte address 0x0 - dummy sync flag']
  #allocation37 [shape = 's32[]', space=sflag, size = 0x4, offset = 0, fixed_abs, tag = 'sflag constant byte address 0x0 - dummy sync flag']
  #allocation38 [shape = 's32[]', space=sflag, size = 0x4, offset = 0, fixed_abs, tag = 'sflag constant byte address 0x0 - dummy sync flag']
  #allocation39 [shape = 's32[]', space=sflag, size = 0x4, offset = 0, fixed_abs, tag = 'sflag constant byte address 0x0 - dummy sync flag']
  #allocation40 [shape = 's32[]', space=sflag, size = 0x4, offset = 0, fixed_abs, tag = 'sflag constant byte address 0x0 - dummy sync flag']
  #allocation41 [shape = 's32[]', space=sflag, size = 0x4, offset = 0, fixed_abs, tag = 'sflag constant byte address 0x0 - dummy sync flag']
  #allocation42 [shape = 's32[]', space=sflag, size = 0x4, offset = 0, fixed_abs, tag = 'sflag constant byte address 0x0 - dummy sync flag']
  %s0 = inlined_call_operand.hbm [shape: s32[256], index: 0, kind: input, shape index: {}]
  %s1 = inlined_call_operand.vmem [shape: s32[256], index: 1, kind: input, shape index: {}]
  %s2 = inlined_call_operand.vmem [shape: s32[256], index: 2, kind: input, shape index: {}]
  %s3 = inlined_call_operand.hbm [shape: f32[64,128], index: 3, kind: input, shape index: {}]
  %s4 = inlined_call_operand.hbm [shape: f32[16,128], index: 4, kind: input, shape index: {}]
  %s5 = inlined_call_operand.hbm [shape: f32[256,128], index: 5, kind: output, shape index: {}]
  %s6 = sld [smem:[#allocation0]]
  $region160: #{tpu_custom_call.1} parent=0
    _
  %s8 = ssub.s32 1, %s6
  %s9 = scalar_select 0, %s8, %s6
  %11 = dma.hbm_to_smem %s0, 32, [#allocation4], [#allocation3]
  %s12 = sshll.u32 %s1, 4
  %s13 = int_to_ptr.vmem [resolvable:$true] %s12
  %15 = dma.vmem_to_smem %s13, 32, [#allocation5], [#allocation3]
  %s16 = sshll.u32 %s2, 4
  %s17 = int_to_ptr.vmem [resolvable:$true] %s16
  %19 = dma.vmem_to_smem %s17, 32, [#allocation6], [#allocation3]
  %20 = dma.done [#allocation3], 96
  %21 = sfence
  $region1: #{tpu_custom_call.1} parent=0
    #allocation7 [shape = 'u8[131072]{0}', space=vmem, size = 0x20000, scoped, tag = 'output window, operand 0']
    #allocation8 [shape = 's32[2]{0}', space=sflag, size = 0x8, scoped, tag = 'scoped memory for tpu_custom_call.1']
    %22 = vsyncpa [#allocation8], 0
    %s23 = scalar_lea.sflag [#allocation8], 1
    %24 = vsyncpa %s23, 0
    loop: start=0, step=1, limit=3
    $region2: #{tpu_custom_call.1} parent=1 // loop_pre_header
      _
    $region3: #{tpu_custom_call.1} parent=1 // loop_header
      %s26 = sphi 0, %s30
      %p27 = scmp.ge.s32.totalorder %s26, 3
      %s35 = sphi 0, %s37
      %s38 = sphi 0, %s35
      %s48 = sphi 0, %s38
    $region4: #{tpu_custom_call.1} parent=1 // loop_header_branch
      %29 = sbr.rel (%p27) target = $region8
    $region5: #{tpu_custom_call.1} parent=1 // loop_body
      %s31 = ssub.s32 %s26, 1
      %s32 = sadd.s32 %s26, 1
      %s33 = ssub.s32 %s26, %s32
      %p34 = scmp.eq.s32.totalorder %s33, 0
      %s36 = sadd.s32 %s35, 1
      %s37 = scalar_select %p34, %s35, %s36
      %p39 = pneg %p34
      %p40 = scmp.eq.s32.totalorder %s26, 1
      %p41 = por %p39, %p40
      %p42 = scmp.ne.s32.totalorder %s35, %s38
      %p43 = scmp.eq.s32.totalorder %s26, 0
      %p44 = por %p42, %p43
      %p45 = scmp.ne.s32.totalorder %s35, %s38
      %p46 = scmp.eq.s32.totalorder %s31, 1
      %p47 = por %p45, %p46
      %p49 = scmp.ne.s32.totalorder %s38, %s48
      %p50 = scmp.eq.s32.totalorder %s31, 0
      %p51 = por %p49, %p50
      %p52 = scmp.lt.s32.totalorder %s26, 2
      // Predicated region
      $region9: #{tpu_custom_call.1} parent=5 // pred_check
        %p53 = pneg %p52
      $region10: #{tpu_custom_call.1} parent=5 // pred_check_branch
        %55 = sbr.rel (%p53) target = $region12
      $region11: #{tpu_custom_call.1} parent=5 // pred_region
        %p56 = pneg %p44
        %p57 = pneg %p41
        %s58 = sand.u32 %s35, 1
        %s59 = scalar_lea.sflag [#allocation8], %s58
        %s60 = sand.u32 %s35, 1
        %s61 = smul.addr %s60, 128
        %s62 = scalar_lea.vmem [#allocation7], %s61
        %s63 = smul.u32 16, %s26
        %s64 = smul.u32 %s26, 128
        loop: start=0, step=1, limit=16
        $region13: #{tpu_custom_call.1} parent=11 // loop_pre_header
          _
        $region14: #{tpu_custom_call.1} parent=11 // loop_header
          %s66 = sphi 0, %s70
          %p67 = scmp.ge.s32.totalorder %s66, 16
        $region15: #{tpu_custom_call.1} parent=11 // loop_header_branch
          %69 = sbr.rel (%p67) target = $region19
        $region16: #{tpu_custom_call.1} parent=11 // loop_body
          %s71 = smul.u32 %s66, 8
          %s72 = sadd.s32 %s64, %s71
          %s73 = sld [smem:[#allocation6 + %s72]]
          %p74 = scmp.eq.s32.totalorder %s73, 1
          // Predicated region
          $region20: #{tpu_custom_call.1} parent=16 // pred_check
            %p75 = pneg %p74
          $region21: #{tpu_custom_call.1} parent=16 // pred_check_branch
            %77 = sbr.rel (%p75) target = $region23
          $region22: #{tpu_custom_call.1} parent=16 // pred_region
            %s78 = sld [smem:[#allocation5 + %s72]]
            %s79 = smul.addr %s78, 16
            %s80 = scalar_lea.hbm %s4, %s79
            %s81 = scalar_lea.vmem %s62, %s71 [#allocation7]
            // Predicated region
            $region24: #{tpu_custom_call.1} parent=22 // pred_check
              _
            $region25: #{tpu_custom_call.1} parent=22 // pred_check_branch
              %83 = sbr.rel target = $region27
            $region26: #{tpu_custom_call.1} parent=22 // pred_region
              %84 = sst [smem:[#allocation11]] [#allocation10]
              %85 = sst [smem:[#allocation12]] [#allocation9]
            $region27: #{tpu_custom_call.1} parent=22 // pred_fallthru
              _
            %87 = shalt.err (0)
            %s89 = sshll.u32 %s81, 4
            %s90 = int_to_ptr.vmem [resolvable:$true] %s89
            %92 = dma.hbm_to_vmem [thread:$0]  %s80, 16, %s90, [#allocation2]
          $region23: #{tpu_custom_call.1} parent=16 // pred_fallthru
            _
          %p93 = scmp.ne.s32.totalorder %s73, 1
          // Predicated region
          $region28: #{tpu_custom_call.1} parent=16 // pred_check
            %p94 = pneg %p93
          $region29: #{tpu_custom_call.1} parent=16 // pred_check_branch
            %96 = sbr.rel (%p94) target = $region31
          $region30: #{tpu_custom_call.1} parent=16 // pred_region
            %s97 = sld [smem:[#allocation4 + %s72]]
            %s98 = smul.addr %s97, 16
            %s99 = scalar_lea.hbm %s3, %s98
            %s100 = scalar_lea.vmem %s62, %s71 [#allocation7]
            // Predicated region
            $region32: #{tpu_custom_call.1} parent=30 // pred_check
              _
            $region33: #{tpu_custom_call.1} parent=30 // pred_check_branch
              %102 = sbr.rel target = $region35
            $region34: #{tpu_custom_call.1} parent=30 // pred_region
              %103 = sst [smem:[#allocation11]] [#allocation14]
              %104 = sst [smem:[#allocation12]] [#allocation13]
            $region35: #{tpu_custom_call.1} parent=30 // pred_fallthru
              _
            %106 = shalt.err (0)
            %s108 = sshll.u32 %s100, 4
            %s109 = int_to_ptr.vmem [resolvable:$true] %s108
            %111 = dma.hbm_to_vmem [thread:$0]  %s99, 16, %s109, [#allocation2]
          $region31: #{tpu_custom_call.1} parent=16 // pred_fallthru
            _
          %s112 = sadd.s32 %s71, 1
          %s113 = sadd.s32 %s64, %s112
          %s114 = sld [smem:[#allocation6 + %s113]]
          %p115 = scmp.eq.s32.totalorder %s114, 1
          // Predicated region
          $region36: #{tpu_custom_call.1} parent=16 // pred_check
            %p116 = pneg %p115
          $region37: #{tpu_custom_call.1} parent=16 // pred_check_branch
            %118 = sbr.rel (%p116) target = $region39
          $region38: #{tpu_custom_call.1} parent=16 // pred_region
            %s119 = sld [smem:[#allocation5 + %s113]]
            %s120 = smul.addr %s119, 16
            %s121 = scalar_lea.hbm %s4, %s120
            %s122 = scalar_lea.vmem %s62, %s112 [#allocation7]
            // Predicated region
            $region40: #{tpu_custom_call.1} parent=38 // pred_check
              _
            $region41: #{tpu_custom_call.1} parent=38 // pred_check_branch
              %124 = sbr.rel target = $region43
            $region42: #{tpu_custom_call.1} parent=38 // pred_region
              %125 = sst [smem:[#allocation11]] [#allocation16]
              %126 = sst [smem:[#allocation12]] [#allocation15]
            $region43: #{tpu_custom_call.1} parent=38 // pred_fallthru
              _
            %128 = shalt.err (0)
            %s130 = sshll.u32 %s122, 4
            %s131 = int_to_ptr.vmem [resolvable:$true] %s130
            %133 = dma.hbm_to_vmem [thread:$0]  %s121, 16, %s131, [#allocation2]
          $region39: #{tpu_custom_call.1} parent=16 // pred_fallthru
            _
          %p134 = scmp.ne.s32.totalorder %s114, 1
          // Predicated region
          $region44: #{tpu_custom_call.1} parent=16 // pred_check
            %p135 = pneg %p134
          $region45: #{tpu_custom_call.1} parent=16 // pred_check_branch
            %137 = sbr.rel (%p135) target = $region47
          $region46: #{tpu_custom_call.1} parent=16 // pred_region
            %s138 = sld [smem:[#allocation4 + %s113]]
            %s139 = smul.addr %s138, 16
            %s140 = scalar_lea.hbm %s3, %s139
            %s141 = scalar_lea.vmem %s62, %s112 [#allocation7]
            // Predicated region
            $region48: #{tpu_custom_call.1} parent=46 // pred_check
              _
            $region49: #{tpu_custom_call.1} parent=46 // pred_check_branch
              %143 = sbr.rel target = $region51
            $region50: #{tpu_custom_call.1} parent=46 // pred_region
              %144 = sst [smem:[#allocation11]] [#allocation18]
              %145 = sst [smem:[#allocation12]] [#allocation17]
            $region51: #{tpu_custom_call.1} parent=46 // pred_fallthru
              _
            %147 = shalt.err (0)
            %s149 = sshll.u32 %s141, 4
            %s150 = int_to_ptr.vmem [resolvable:$true] %s149
            %152 = dma.hbm_to_vmem [thread:$0]  %s140, 16, %s150, [#allocation2]
          $region47: #{tpu_custom_call.1} parent=16 // pred_fallthru
            _
          %s153 = sadd.s32 %s71, 2
          %s154 = sadd.s32 %s64, %s153
          %s155 = sld [smem:[#allocation6 + %s154]]
          %p156 = scmp.eq.s32.totalorder %s155, 1
          // Predicated region
          $region52: #{tpu_custom_call.1} parent=16 // pred_check
            %p157 = pneg %p156
          $region53: #{tpu_custom_call.1} parent=16 // pred_check_branch
            %159 = sbr.rel (%p157) target = $region55
          $region54: #{tpu_custom_call.1} parent=16 // pred_region
            %s160 = sld [smem:[#allocation5 + %s154]]
            %s161 = smul.addr %s160, 16
            %s162 = scalar_lea.hbm %s4, %s161
            %s163 = scalar_lea.vmem %s62, %s153 [#allocation7]
            // Predicated region
            $region56: #{tpu_custom_call.1} parent=54 // pred_check
              _
            $region57: #{tpu_custom_call.1} parent=54 // pred_check_branch
              %165 = sbr.rel target = $region59
            $region58: #{tpu_custom_call.1} parent=54 // pred_region
              %166 = sst [smem:[#allocation11]] [#allocation20]
              %167 = sst [smem:[#allocation12]] [#allocation19]
            $region59: #{tpu_custom_call.1} parent=54 // pred_fallthru
              _
            %169 = shalt.err (0)
            %s171 = sshll.u32 %s163, 4
            %s172 = int_to_ptr.vmem [resolvable:$true] %s171
            %174 = dma.hbm_to_vmem [thread:$0]  %s162, 16, %s172, [#allocation2]
          $region55: #{tpu_custom_call.1} parent=16 // pred_fallthru
            _
          %p175 = scmp.ne.s32.totalorder %s155, 1
          // Predicated region
          $region60: #{tpu_custom_call.1} parent=16 // pred_check
            %p176 = pneg %p175
          $region61: #{tpu_custom_call.1} parent=16 // pred_check_branch
            %178 = sbr.rel (%p176) target = $region63
          $region62: #{tpu_custom_call.1} parent=16 // pred_region
            %s179 = sld [smem:[#allocation4 + %s154]]
            %s180 = smul.addr %s179, 16
            %s181 = scalar_lea.hbm %s3, %s180
            %s182 = scalar_lea.vmem %s62, %s153 [#allocation7]
            // Predicated region
            $region64: #{tpu_custom_call.1} parent=62 // pred_check
              _
            $region65: #{tpu_custom_call.1} parent=62 // pred_check_branch
              %184 = sbr.rel target = $region67
            $region66: #{tpu_custom_call.1} parent=62 // pred_region
              %185 = sst [smem:[#allocation11]] [#allocation22]
              %186 = sst [smem:[#allocation12]] [#allocation21]
            $region67: #{tpu_custom_call.1} parent=62 // pred_fallthru
              _
            %188 = shalt.err (0)
            %s190 = sshll.u32 %s182, 4
            %s191 = int_to_ptr.vmem [resolvable:$true] %s190
            %193 = dma.hbm_to_vmem [thread:$0]  %s181, 16, %s191, [#allocation2]
          $region63: #{tpu_custom_call.1} parent=16 // pred_fallthru
            _
          %s194 = sadd.s32 %s71, 3
          %s195 = sadd.s32 %s64, %s194
          %s196 = sld [smem:[#allocation6 + %s195]]
          %p197 = scmp.eq.s32.totalorder %s196, 1
          // Predicated region
          $region68: #{tpu_custom_call.1} parent=16 // pred_check
            %p198 = pneg %p197
          $region69: #{tpu_custom_call.1} parent=16 // pred_check_branch
            %200 = sbr.rel (%p198) target = $region71
          $region70: #{tpu_custom_call.1} parent=16 // pred_region
            %s201 = sld [smem:[#allocation5 + %s195]]
            %s202 = smul.addr %s201, 16
            %s203 = scalar_lea.hbm %s4, %s202
            %s204 = scalar_lea.vmem %s62, %s194 [#allocation7]
            // Predicated region
            $region72: #{tpu_custom_call.1} parent=70 // pred_check
              _
            $region73: #{tpu_custom_call.1} parent=70 // pred_check_branch
              %206 = sbr.rel target = $region75
            $region74: #{tpu_custom_call.1} parent=70 // pred_region
              %207 = sst [smem:[#allocation11]] [#allocation24]
              %208 = sst [smem:[#allocation12]] [#allocation23]
            $region75: #{tpu_custom_call.1} parent=70 // pred_fallthru
              _
            %210 = shalt.err (0)
            %s212 = sshll.u32 %s204, 4
            %s213 = int_to_ptr.vmem [resolvable:$true] %s212
            %215 = dma.hbm_to_vmem [thread:$0]  %s203, 16, %s213, [#allocation2]
          $region71: #{tpu_custom_call.1} parent=16 // pred_fallthru
            _
          %p216 = scmp.ne.s32.totalorder %s196, 1
          // Predicated region
          $region76: #{tpu_custom_call.1} parent=16 // pred_check
            %p217 = pneg %p216
          $region77: #{tpu_custom_call.1} parent=16 // pred_check_branch
            %219 = sbr.rel (%p217) target = $region79
          $region78: #{tpu_custom_call.1} parent=16 // pred_region
            %s220 = sld [smem:[#allocation4 + %s195]]
            %s221 = smul.addr %s220, 16
            %s222 = scalar_lea.hbm %s3, %s221
            %s223 = scalar_lea.vmem %s62, %s194 [#allocation7]
            // Predicated region
            $region80: #{tpu_custom_call.1} parent=78 // pred_check
              _
            $region81: #{tpu_custom_call.1} parent=78 // pred_check_branch
              %225 = sbr.rel target = $region83
            $region82: #{tpu_custom_call.1} parent=78 // pred_region
              %226 = sst [smem:[#allocation11]] [#allocation26]
              %227 = sst [smem:[#allocation12]] [#allocation25]
            $region83: #{tpu_custom_call.1} parent=78 // pred_fallthru
              _
            %229 = shalt.err (0)
            %s231 = sshll.u32 %s223, 4
            %s232 = int_to_ptr.vmem [resolvable:$true] %s231
            %234 = dma.hbm_to_vmem [thread:$0]  %s222, 16, %s232, [#allocation2]
          $region79: #{tpu_custom_call.1} parent=16 // pred_fallthru
            _
          %s235 = sadd.s32 %s71, 4
          %s236 = sadd.s32 %s64, %s235
          %s237 = sld [smem:[#allocation6 + %s236]]
          %p238 = scmp.eq.s32.totalorder %s237, 1
          // Predicated region
          $region84: #{tpu_custom_call.1} parent=16 // pred_check
            %p239 = pneg %p238
          $region85: #{tpu_custom_call.1} parent=16 // pred_check_branch
            %241 = sbr.rel (%p239) target = $region87
          $region86: #{tpu_custom_call.1} parent=16 // pred_region
            %s242 = sld [smem:[#allocation5 + %s236]]
            %s243 = smul.addr %s242, 16
            %s244 = scalar_lea.hbm %s4, %s243
            %s245 = scalar_lea.vmem %s62, %s235 [#allocation7]
            // Predicated region
            $region88: #{tpu_custom_call.1} parent=86 // pred_check
              _
            $region89: #{tpu_custom_call.1} parent=86 // pred_check_branch
              %247 = sbr.rel target = $region91
            $region90: #{tpu_custom_call.1} parent=86 // pred_region
              %248 = sst [smem:[#allocation11]] [#allocation28]
              %249 = sst [smem:[#allocation12]] [#allocation27]
            $region91: #{tpu_custom_call.1} parent=86 // pred_fallthru
              _
            %251 = shalt.err (0)
            %s253 = sshll.u32 %s245, 4
            %s254 = int_to_ptr.vmem [resolvable:$true] %s253
            %256 = dma.hbm_to_vmem [thread:$0]  %s244, 16, %s254, [#allocation2]
          $region87: #{tpu_custom_call.1} parent=16 // pred_fallthru
            _
          %p257 = scmp.ne.s32.totalorder %s237, 1
          // Predicated region
          $region92: #{tpu_custom_call.1} parent=16 // pred_check
            %p258 = pneg %p257
          $region93: #{tpu_custom_call.1} parent=16 // pred_check_branch
            %260 = sbr.rel (%p258) target = $region95
          $region94: #{tpu_custom_call.1} parent=16 // pred_region
            %s261 = sld [smem:[#allocation4 + %s236]]
            %s262 = smul.addr %s261, 16
            %s263 = scalar_lea.hbm %s3, %s262
            %s264 = scalar_lea.vmem %s62, %s235 [#allocation7]
            // Predicated region
            $region96: #{tpu_custom_call.1} parent=94 // pred_check
              _
            $region97: #{tpu_custom_call.1} parent=94 // pred_check_branch
              %266 = sbr.rel target = $region99
            $region98: #{tpu_custom_call.1} parent=94 // pred_region
              %267 = sst [smem:[#allocation11]] [#allocation30]
              %268 = sst [smem:[#allocation12]] [#allocation29]
            $region99: #{tpu_custom_call.1} parent=94 // pred_fallthru
              _
            %270 = shalt.err (0)
            %s272 = sshll.u32 %s264, 4
            %s273 = int_to_ptr.vmem [resolvable:$true] %s272
            %275 = dma.hbm_to_vmem [thread:$0]  %s263, 16, %s273, [#allocation2]
          $region95: #{tpu_custom_call.1} parent=16 // pred_fallthru
            _
          %s276 = sadd.s32 %s71, 5
          %s277 = sadd.s32 %s64, %s276
          %s278 = sld [smem:[#allocation6 + %s277]]
          %p279 = scmp.eq.s32.totalorder %s278, 1
          // Predicated region
          $region100: #{tpu_custom_call.1} parent=16 // pred_check
            %p280 = pneg %p279
          $region101: #{tpu_custom_call.1} parent=16 // pred_check_branch
            %282 = sbr.rel (%p280) target = $region103
          $region102: #{tpu_custom_call.1} parent=16 // pred_region
            %s283 = sld [smem:[#allocation5 + %s277]]
            %s284 = smul.addr %s283, 16
            %s285 = scalar_lea.hbm %s4, %s284
            %s286 = scalar_lea.vmem %s62, %s276 [#allocation7]
            // Predicated region
            $region104: #{tpu_custom_call.1} parent=102 // pred_check
              _
            $region105: #{tpu_custom_call.1} parent=102 // pred_check_branch
              %288 = sbr.rel target = $region107
            $region106: #{tpu_custom_call.1} parent=102 // pred_region
              %289 = sst [smem:[#allocation11]] [#allocation32]
              %290 = sst [smem:[#allocation12]] [#allocation31]
            $region107: #{tpu_custom_call.1} parent=102 // pred_fallthru
              _
            %292 = shalt.err (0)
            %s294 = sshll.u32 %s286, 4
            %s295 = int_to_ptr.vmem [resolvable:$true] %s294
            %297 = dma.hbm_to_vmem [thread:$0]  %s285, 16, %s295, [#allocation2]
          $region103: #{tpu_custom_call.1} parent=16 // pred_fallthru
            _
          %p298 = scmp.ne.s32.totalorder %s278, 1
          // Predicated region
          $region108: #{tpu_custom_call.1} parent=16 // pred_check
            %p299 = pneg %p298
          $region109: #{tpu_custom_call.1} parent=16 // pred_check_branch
            %301 = sbr.rel (%p299) target = $region111
          $region110: #{tpu_custom_call.1} parent=16 // pred_region
            %s302 = sld [smem:[#allocation4 + %s277]]
            %s303 = smul.addr %s302, 16
            %s304 = scalar_lea.hbm %s3, %s303
            %s305 = scalar_lea.vmem %s62, %s276 [#allocation7]
            // Predicated region
            $region112: #{tpu_custom_call.1} parent=110 // pred_check
              _
            $region113: #{tpu_custom_call.1} parent=110 // pred_check_branch
              %307 = sbr.rel target = $region115
            $region114: #{tpu_custom_call.1} parent=110 // pred_region
              %308 = sst [smem:[#allocation11]] [#allocation34]
              %309 = sst [smem:[#allocation12]] [#allocation33]
            $region115: #{tpu_custom_call.1} parent=110 // pred_fallthru
              _
            %311 = shalt.err (0)
            %s313 = sshll.u32 %s305, 4
            %s314 = int_to_ptr.vmem [resolvable:$true] %s313
            %316 = dma.hbm_to_vmem [thread:$0]  %s304, 16, %s314, [#allocation2]
          $region111: #{tpu_custom_call.1} parent=16 // pred_fallthru
            _
          %s317 = sadd.s32 %s71, 6
          %s318 = sadd.s32 %s64, %s317
          %s319 = sld [smem:[#allocation6 + %s318]]
          %p320 = scmp.eq.s32.totalorder %s319, 1
          // Predicated region
          $region116: #{tpu_custom_call.1} parent=16 // pred_check
            %p321 = pneg %p320
          $region117: #{tpu_custom_call.1} parent=16 // pred_check_branch
            %323 = sbr.rel (%p321) target = $region119
          $region118: #{tpu_custom_call.1} parent=16 // pred_region
            %s324 = sld [smem:[#allocation5 + %s318]]
            %s325 = smul.addr %s324, 16
            %s326 = scalar_lea.hbm %s4, %s325
            %s327 = scalar_lea.vmem %s62, %s317 [#allocation7]
            // Predicated region
            $region120: #{tpu_custom_call.1} parent=118 // pred_check
              _
            $region121: #{tpu_custom_call.1} parent=118 // pred_check_branch
              %329 = sbr.rel target = $region123
            $region122: #{tpu_custom_call.1} parent=118 // pred_region
              %330 = sst [smem:[#allocation11]] [#allocation36]
              %331 = sst [smem:[#allocation12]] [#allocation35]
            $region123: #{tpu_custom_call.1} parent=118 // pred_fallthru
              _
            %333 = shalt.err (0)
            %s335 = sshll.u32 %s327, 4
            %s336 = int_to_ptr.vmem [resolvable:$true] %s335
            %338 = dma.hbm_to_vmem [thread:$0]  %s326, 16, %s336, [#allocation2]
          $region119: #{tpu_custom_call.1} parent=16 // pred_fallthru
            _
          %p339 = scmp.ne.s32.totalorder %s319, 1
          // Predicated region
          $region124: #{tpu_custom_call.1} parent=16 // pred_check
            %p340 = pneg %p339
          $region125: #{tpu_custom_call.1} parent=16 // pred_check_branch
            %342 = sbr.rel (%p340) target = $region127
          $region126: #{tpu_custom_call.1} parent=16 // pred_region
            %s343 = sld [smem:[#allocation4 + %s318]]
            %s344 = smul.addr %s343, 16
            %s345 = scalar_lea.hbm %s3, %s344
            %s346 = scalar_lea.vmem %s62, %s317 [#allocation7]
            // Predicated region
            $region128: #{tpu_custom_call.1} parent=126 // pred_check
              _
            $region129: #{tpu_custom_call.1} parent=126 // pred_check_branch
              %348 = sbr.rel target = $region131
            $region130: #{tpu_custom_call.1} parent=126 // pred_region
              %349 = sst [smem:[#allocation11]] [#allocation38]
              %350 = sst [smem:[#allocation12]] [#allocation37]
            $region131: #{tpu_custom_call.1} parent=126 // pred_fallthru
              _
            %352 = shalt.err (0)
            %s354 = sshll.u32 %s346, 4
            %s355 = int_to_ptr.vmem [resolvable:$true] %s354
            %357 = dma.hbm_to_vmem [thread:$0]  %s345, 16, %s355, [#allocation2]
          $region127: #{tpu_custom_call.1} parent=16 // pred_fallthru
            _
          %s358 = sadd.s32 %s71, 7
          %s359 = sadd.s32 %s64, %s358
          %s360 = sld [smem:[#allocation6 + %s359]]
          %p361 = scmp.eq.s32.totalorder %s360, 1
          // Predicated region
          $region132: #{tpu_custom_call.1} parent=16 // pred_check
            %p362 = pneg %p361
          $region133: #{tpu_custom_call.1} parent=16 // pred_check_branch
            %364 = sbr.rel (%p362) target = $region135
          $region134: #{tpu_custom_call.1} parent=16 // pred_region
            %s365 = sld [smem:[#allocation5 + %s359]]
            %s366 = smul.addr %s365, 16
            %s367 = scalar_lea.hbm %s4, %s366
            %s368 = scalar_lea.vmem %s62, %s358 [#allocation7]
            // Predicated region
            $region136: #{tpu_custom_call.1} parent=134 // pred_check
              _
            $region137: #{tpu_custom_call.1} parent=134 // pred_check_branch
              %370 = sbr.rel target = $region139
            $region138: #{tpu_custom_call.1} parent=134 // pred_region
              %371 = sst [smem:[#allocation11]] [#allocation40]
              %372 = sst [smem:[#allocation12]] [#allocation39]
            $region139: #{tpu_custom_call.1} parent=134 // pred_fallthru
              _
            %374 = shalt.err (0)
            %s376 = sshll.u32 %s368, 4
            %s377 = int_to_ptr.vmem [resolvable:$true] %s376
            %379 = dma.hbm_to_vmem [thread:$0]  %s367, 16, %s377, [#allocation2]
          $region135: #{tpu_custom_call.1} parent=16 // pred_fallthru
            _
          %p380 = scmp.ne.s32.totalorder %s360, 1
          // Predicated region
          $region140: #{tpu_custom_call.1} parent=16 // pred_check
            %p381 = pneg %p380
          $region141: #{tpu_custom_call.1} parent=16 // pred_check_branch
            %383 = sbr.rel (%p381) target = $region143
          $region142: #{tpu_custom_call.1} parent=16 // pred_region
            %s384 = sld [smem:[#allocation4 + %s359]]
            %s385 = smul.addr %s384, 16
            %s386 = scalar_lea.hbm %s3, %s385
            %s387 = scalar_lea.vmem %s62, %s358 [#allocation7]
            // Predicated region
            $region144: #{tpu_custom_call.1} parent=142 // pred_check
              _
            $region145: #{tpu_custom_call.1} parent=142 // pred_check_branch
              %389 = sbr.rel target = $region147
            $region146: #{tpu_custom_call.1} parent=142 // pred_region
              %390 = sst [smem:[#allocation11]] [#allocation42]
              %391 = sst [smem:[#allocation12]] [#allocation41]
            $region147: #{tpu_custom_call.1} parent=142 // pred_fallthru
              _
            %393 = shalt.err (0)
            %s395 = sshll.u32 %s387, 4
            %s396 = int_to_ptr.vmem [resolvable:$true] %s395
            %398 = dma.hbm_to_vmem [thread:$0]  %s386, 16, %s396, [#allocation2]
          $region143: #{tpu_custom_call.1} parent=16 // pred_fallthru
            _
        $region17: #{tpu_custom_call.1} parent=11 // loop_footer
          %s70 = sadd.s32 1, %s66
        $region18: #{tpu_custom_call.1} parent=11 // loop_footer_branch
          %65 = sbr.rel target = $region14
        $region19: #{tpu_custom_call.1} parent=11 // loop_exit
          _
        %s399 = smul.u32 128, 1
        %s400 = sshll.u32 %s399, 4
        %401 = dma.done [#allocation2], %s400
        %s402 = sand.u32 %s35, 1
        %s403 = scalar_lea.sflag [#allocation8], %s402
        %s404 = sand.u32 %s35, 1
        %s405 = smul.addr %s404, 128
        %s406 = scalar_lea.vmem [#allocation7], %s405
        // Predicated region
        $region148: #{tpu_custom_call.1} parent=11 // pred_check
          %p407 = pneg %p41
        $region149: #{tpu_custom_call.1} parent=11 // pred_check_branch
          %409 = sbr.rel (%p407) target = $region151
        $region150: #{tpu_custom_call.1} parent=11 // pred_region
          %s410 = smul.u32 16, %s26
          %s412 = ssub.s32 2048, 2048
          %413 = vsyncadd %s403, %s412
          %s414 = smul.addr %s410, 128
          %s415 = scalar_lea.hbm %s5, %s414
          %s416 = sshll.u32 %s406, 4
          %s417 = int_to_ptr.vmem [resolvable:$true] %s416
          %422 = dma.vmem_to_hbm [thread:$0]  %s417, 2048, %s415, %s403, 128, 128, 8
        $region151: #{tpu_custom_call.1} parent=11 // pred_fallthru
          _
      $region12: #{tpu_custom_call.1} parent=5 // pred_fallthru
        _
      %p423 = scmp.le.s32.totalorder 1, %s26
      // Predicated region
      $region152: #{tpu_custom_call.1} parent=5 // pred_check
        %p424 = pneg %p423
      $region153: #{tpu_custom_call.1} parent=5 // pred_check_branch
        %426 = sbr.rel (%p424) target = $region155
      $region154: #{tpu_custom_call.1} parent=5 // pred_region
        %s427 = ssub.s32 %s26, 1
        // Predicated region
        $region156: #{tpu_custom_call.1} parent=154 // pred_check
          %p428 = pneg %p47
        $region157: #{tpu_custom_call.1} parent=154 // pred_check_branch
          %430 = sbr.rel (%p428) target = $region159
        $region158: #{tpu_custom_call.1} parent=154 // pred_region
          %s431 = sand.u32 %s38, 1
          %s432 = scalar_lea.sflag [#allocation8], %s431
          %s433 = sand.u32 %s38, 1
          %s434 = smul.addr %s433, 128
          %s435 = scalar_lea.vmem [#allocation7], %s434
          %436 = dma.done %s432, 2048
        $region159: #{tpu_custom_call.1} parent=154 // pred_fallthru
          _
      $region155: #{tpu_custom_call.1} parent=5 // pred_fallthru
        _
    $region6: #{tpu_custom_call.1} parent=1 // loop_footer
      %s30 = sadd.s32 1, %s26
    $region7: #{tpu_custom_call.1} parent=1 // loop_footer_branch
      %25 = sbr.rel target = $region3
    $region8: #{tpu_custom_call.1} parent=1 // loop_exit
      _
    %437 = vsyncpa [#allocation8], 1
    %s438 = scalar_lea.sflag [#allocation8], 1
    %439 = vsyncpa %s438, 1
  %440 = vsyncmov [#allocation2]
  %s441 = vpop.sfrf %440
  %p442 = scmp.eq.s32.totalorder %s441, 0
  %p443 = pneg %p442
  %445 = shalt.err (%p443)

</llo_original>
